<compile_context>
chip_gen: v5e
topology: v5e:2x2
jax: 0.10.0
libtpu: 0.0.40
codegen_flags: <defaults>
</compile_context>

<pallas_src>
import jax
import jax.numpy as jnp
from jax.experimental import pallas as pl
from jax.experimental.pallas import tpu as pltpu


def _round_up(x, m):
    return ((x + m - 1) // m) * m


def _fused_linear_kernel(x_ref, w_ref, b_ref, o_ref):
    # Single MXU pass: (tile_B, f_in) @ (f_in, f_out), f32 accumulation,
    # bias added on the VPU.  x is cast in-kernel (no wrapper-side cast pass).
    x = x_ref[...].astype(w_ref.dtype)
    acc = jnp.dot(x, w_ref[...], preferred_element_type=jnp.float32)
    o_ref[...] = (acc + b_ref[...]).astype(o_ref.dtype)


def make_fused_params(params, compute_dtype=jnp.float32):
    """Exact algebraic collapse of the three Linear layers (no activations).

    Done once at parameter-setup time (static), not per forward call.
    Weights are stored as PyTorch weight.T, i.e. (in_features, out_features).
    """
    w1, b1, w2, b2, w3, b3 = (params[k] for k in ("w1", "b1", "w2", "b2", "w3", "b3"))
    w_fused = (w1 @ w2) @ w3                     # (f_in, f_out)
    b_fused = ((b1 @ w2) + b2) @ w3 + b3         # (1, f_out)
    return {
        "w": w_fused.astype(compute_dtype),      # MXU operand dtype (f32 or bf16)
        "b": b_fused.astype(jnp.float32),        # bias always added in f32
    }


def autoencoder_forward(x, fused, *, batch_tile=None, out_dtype=None):
    """Fused 3-layer encoder forward on TPU via a single Pallas matmul.

    x:     (B, input_dims*3) float32 (streamed in native dtype, cast in-kernel)
    fused: dict from make_fused_params with "w" (f_in, f_out), "b" (1, f_out)
    """
    w, b = fused["w"], fused["b"]
    B, f_in = x.shape
    f_out = w.shape[1]
    out_dtype = jnp.dtype(out_dtype or x.dtype)

    # --- Batch tiling: >=2 grid steps when possible (v7x: 2 TensorCores share
    #     the "parallel" axis), larger tiles for large B to amortize per-step
    #     overhead.  No batch padding: ragged last block is masked by Pallas. ---
    if batch_tile is None:
        batch_tile = min(1024, max(16, _round_up(pl.cdiv(B, 2), 16)))
    batch_tile = min(max(16, _round_up(batch_tile, 16)), _round_up(B, 16))
    grid = (pl.cdiv(B, batch_tile),)

    # --- VMEM budget: double-buffered streamed x/out tiles + resident W, b. ---
    vmem_bytes = (2 * batch_tile * f_in * x.dtype.itemsize
                  + 2 * batch_tile * f_out * out_dtype.itemsize
                  + f_in * f_out * w.dtype.itemsize
                  + f_out * 4)
    vmem_limit = int(min(2 * vmem_bytes + (4 << 20), 48 << 20))  # v7x-safe cap

    cost = pl.CostEstimate(
        flops=2 * B * f_in * f_out,
        transcendentals=0,
        bytes_accessed=(B * f_in * x.dtype.itemsize
                        + B * f_out * out_dtype.itemsize
                        + f_in * f_out * w.dtype.itemsize
                        + f_out * 4),
    )

    out = pl.pallas_call(
        _fused_linear_kernel,
        out_shape=jax.ShapeDtypeStruct((B, f_out), out_dtype),
        grid_spec=pltpu.PrefetchScalarGridSpec(
            num_scalar_prefetch=0,
            grid=grid,
            in_specs=[
                pl.BlockSpec((batch_tile, f_in), lambda i: (i, 0)),  # streamed x tile
                pl.BlockSpec((f_in, f_out), lambda i: (0, 0)),       # resident fused W
                pl.BlockSpec((1, f_out), lambda i: (0, 0)),          # resident fused b
            ],
            out_specs=pl.BlockSpec((batch_tile, f_out), lambda i: (i, 0)),
        ),
        compiler_params=pltpu.CompilerParams(
            dimension_semantics=("parallel",),
            vmem_limit_bytes=vmem_limit,
        ),
        cost_estimate=cost,
    )(x, w, b)

    return out


def init_params(key, input_dims, output_dims):
    """PyTorch nn.Linear-style init (uniform +-1/sqrt(fan_in)); weights stored
    as (in_features, out_features) = PyTorch weight.T so the math is x @ w + b."""
    f_in = input_dims * 3
    dims = [(f_in, 256), (256, 128), (128, output_dims)]
    params = {}
    for n, (din, dout) in enumerate(dims, start=1):
        key, kw, kb = jax.random.split(key, 3)
        bound = 1.0 / jnp.sqrt(jnp.float32(din))
        params[f"w{n}"] = jax.random.uniform(kw, (din, dout), jnp.float32, -bound, bound)
        params[f"b{n}"] = jax.random.uniform(kb, (1, dout), jnp.float32, -bound, bound)
    return params


def reference_forward(x, params):
    h = x @ params["w1"] + params["b1"]
    h = h @ params["w2"] + params["b2"]
    h = h @ params["w3"] + params["b3"]
    return h


if __name__ == "__main__":
    input_dims = 16     # -> in_features = 48
    output_dims = 32
    batch = 8

    key = jax.random.PRNGKey(0)
    key, kx = jax.random.split(key)
    x = jax.random.normal(kx, (batch, input_dims * 3), jnp.float32)
    params = init_params(key, input_dims, output_dims)

    ref = reference_forward(x, params)

    # Strict path: fused weights kept in f32 (matches layered PyTorch math up
    # to fp reassociation of the collapsed weight product).
    fused_f32 = make_fused_params(params, compute_dtype=jnp.float32)
    out_f32 = jax.block_until_ready(autoencoder_forward(x, fused_f32))
    assert out_f32.shape == (batch, output_dims)
    assert jnp.allclose(out_f32, ref, atol=1e-3, rtol=1e-3), "f32 path mismatch"

    # Fast path: bf16 MXU operands (fused W in bf16, x cast in-kernel),
    # f32 accumulation -> looser tolerance.
    fused_bf16 = make_fused_params(params, compute_dtype=jnp.bfloat16)
    out_bf16 = jax.block_until_ready(autoencoder_forward(x, fused_bf16))
    assert out_bf16.shape == (batch, output_dims)
    assert jnp.allclose(out_bf16, ref, atol=3e-2, rtol=3e-2), "bf16 path mismatch"

    # Larger, non-multiple batch: exercises the ragged last grid block (no
    # jnp.pad of x, no post-call slice) and a multi-step "parallel" grid.
    key, kx2 = jax.random.split(key)
    x_big = jax.random.normal(kx2, (1000, input_dims * 3), jnp.float32)
    out_big = jax.block_until_ready(autoencoder_forward(x_big, fused_bf16))
    assert out_big.shape == (1000, output_dims)
    assert jnp.allclose(out_big, reference_forward(x_big, params),
                        atol=3e-2, rtol=3e-2), "tiled path mismatch"

    print("KERNEL_OK")
</pallas_src>

<mosaic_0001>
module attributes {stable_mosaic.version = 11 : i64} {
  func.func @_fused_linear_kernel(%arg0: i32, %arg1: memref<16x48xf32, #tpu.memory_space<vmem>>, %arg2: memref<48x32xf32, #tpu.memory_space<vmem>>, %arg3: memref<1x32xf32, #tpu.memory_space<vmem>>, %arg4: memref<16x32xf32, #tpu.memory_space<vmem>>) attributes {dimension_semantics = [#tpu.dimension_semantics<parallel>], iteration_bounds = array<i64: 1>, scalar_prefetch = 0 : i64, scratch_operands = 0 : i64, tpu.core_type = #tpu.core_type<tc>, window_params = [{transform_indices = @transform_0, window_bounds = array<i64: 16, 48>}, {pipeline_mode = #tpu.pipeline_mode<synchronous>, transform_indices = @transform_1, window_bounds = array<i64: 48, 32>}, {pipeline_mode = #tpu.pipeline_mode<synchronous>, transform_indices = @transform_2, window_bounds = array<i64: 1, 32>}, {transform_indices = @transform_3, window_bounds = array<i64: 16, 32>}]} {
    %c0 = arith.constant 0 : index
    %c0_0 = arith.constant 0 : index
    %0 = vector.load %arg1[%c0, %c0_0] : memref<16x48xf32, #tpu.memory_space<vmem>>, vector<16x48xf32>
    %c0_1 = arith.constant 0 : index
    %c0_2 = arith.constant 0 : index
    %1 = vector.load %arg2[%c0_1, %c0_2] : memref<48x32xf32, #tpu.memory_space<vmem>>, vector<48x32xf32>
    %cst = arith.constant dense<0.000000e+00> : vector<16x32xf32>
    %2 = tpu.matmul %0, %1, %cst {dimension_numbers = #tpu.dot_dimension_numbers<[1], [0], [0], [1], [0, 0, 1, 1], [], []>} : vector<16x48xf32>, vector<48x32xf32>, vector<16x32xf32> -> vector<16x32xf32>
    %c0_3 = arith.constant 0 : index
    %c0_4 = arith.constant 0 : index
    %3 = vector.load %arg3[%c0_3, %c0_4] : memref<1x32xf32, #tpu.memory_space<vmem>>, vector<1x32xf32>
    %4 = vector.broadcast %3 : vector<1x32xf32> to vector<16x32xf32>
    %5 = arith.addf %2, %4 : vector<16x32xf32>
    %c0_5 = arith.constant 0 : index
    %c0_6 = arith.constant 0 : index
    %6 = vector.load %arg4[%c0_5, %c0_6] : memref<16x32xf32, #tpu.memory_space<vmem>>, vector<16x32xf32>
    tpu.vector_store %arg4[%c0_5, %c0_6], %5 {strides = array<i32>} : memref<16x32xf32, #tpu.memory_space<vmem>>, vector<16x32xf32>,
    return
  }
  func.func @transform_0(%arg0: i32) -> (i32, i32) {
    %c0_i32 = arith.constant 0 : i32
    %c0_i32_0 = arith.constant 0 : i32
    return %arg0, %c0_i32 : i32, i32
  }
  func.func @transform_1(%arg0: i32) -> (i32, i32) {
    %c0_i32 = arith.constant 0 : i32
    %c0_i32_0 = arith.constant 0 : i32
    %c0_i32_1 = arith.constant 0 : i32
    return %c0_i32, %c0_i32_0 : i32, i32
  }
  func.func @transform_2(%arg0: i32) -> (i32, i32) {
    %c0_i32 = arith.constant 0 : i32
    %c0_i32_0 = arith.constant 0 : i32
    %c0_i32_1 = arith.constant 0 : i32
    return %c0_i32, %c0_i32_0 : i32, i32
  }
  func.func @transform_3(%arg0: i32) -> (i32, i32) {
    %c0_i32 = arith.constant 0 : i32
    %c0_i32_0 = arith.constant 0 : i32
    return %arg0, %c0_i32 : i32, i32
  }
}

</mosaic_0001>

<llo_original>
// kernel: tpu_custom_call.1
$region0: #{tpu_custom_call.1}
  #allocation0 [shape = 'u32[]', space=smem, size = 0x4, offset = 0x4, fixed_abs, tag = 'smem constant byte address 0x4 - core index']
  #allocation1 [shape = 'u32[72,128]{1,0:T(1,128)}', space=vmem, size = 0x9000, scoped, tag = 'internal scratch']
  %s0 = inlined_call_operand.vmem [shape: f32[8,48], index: 0, kind: input, shape index: {}]
  %s1 = inlined_call_operand.vmem [shape: f32[48,32], index: 1, kind: input, shape index: {}]
  %s2 = inlined_call_operand.vmem [shape: f32[1,32], index: 2, kind: input, shape index: {}]
  %s3 = inlined_call_operand.hbm [shape: f32[8,32], index: 3, kind: output, shape index: {}]
  %s4 = sld [smem:[#allocation0]]
  $region22: #{tpu_custom_call.1} parent=0
    _
  %s6 = ssub.s32 1, %s4
  %s7 = scalar_select 0, %s6, %s4
  $region1: #{tpu_custom_call.1} parent=0
    #allocation2 [shape = 'u8[8192]{0}', space=vmem, size = 0x2000, scoped, tag = 'output window, operand 0, single buffered']
    #allocation3 [shape = 's32[1]{0}', space=sflag, size = 0x4, scoped, tag = 'scoped memory for tpu_custom_call.1']
    %8 = vsyncpa [#allocation3], 0
    // Predicated region
    $region2: #{tpu_custom_call.1} parent=1 // pred_check
      _
    $region3: #{tpu_custom_call.1} parent=1 // pred_check_branch
      %10 = sbr.rel (0) target = $region5
    $region4: #{tpu_custom_call.1} parent=1 // pred_region
      _
    $region5: #{tpu_custom_call.1} parent=1 // pred_fallthru
      _
    // Predicated region
    $region6: #{tpu_custom_call.1} parent=1 // pred_check
      _
    $region7: #{tpu_custom_call.1} parent=1 // pred_check_branch
      %12 = sbr.rel (0) target = $region9
    $region8: #{tpu_custom_call.1} parent=1 // pred_region
      _
    $region9: #{tpu_custom_call.1} parent=1 // pred_fallthru
      _
    // Predicated region
    $region10: #{tpu_custom_call.1} parent=1 // pred_check
      _
    $region11: #{tpu_custom_call.1} parent=1 // pred_check_branch
      %14 = sbr.rel (0) target = $region13
    $region12: #{tpu_custom_call.1} parent=1 // pred_region
      _
    $region13: #{tpu_custom_call.1} parent=1 // pred_fallthru
      _
    %v15 = vld [vmem:[%s0] sm:$0xff]
    %v16 = vld [vmem:[%s0 + $0x8] sm:$0xff]
    %v17 = vld [vmem:[%s1] sm:$0xff]
    %v18 = vld [vmem:[%s1 + $0x8] sm:$0xff]
    %v19 = vld [vmem:[%s1 + $0x10] sm:$0xff]
    %v20 = vld [vmem:[%s1 + $0x18] sm:$0xff]
    %v21 = vld [vmem:[%s1 + $0x20] sm:$0xff]
    %v22 = vld [vmem:[%s1 + $0x28] sm:$0xff]
    %v23 = vld [vmem:[%s2] sm:$0x1]
    %v25 = vperm.slane %v23, 0
    %vm27 = vcmask 392192
    %v29 = vsel %vm27, %v15, 0
    %v32 = vsel %vm27, %v16, 0
    %34 = vmatpush.msra.mxu0 0.0
    %35 = vmatpush.msra.mxu0 0.0
    %36 = vmatpush.msra.mxu0 0.0
    %37 = vmatpush.msra.mxu0 0.0
    %38 = vmatpush.msra.mxu0 0.0
    %39 = vmatpush.msra.mxu0 0.0
    %40 = vmatpush.msra.mxu0 0.0
    %41 = vmatpush.msra.mxu0 0.0
    %42 = vmatpush.msra.mxu0 0.0
    %43 = vmatpush.msra.mxu0 0.0
    %44 = vmatpush.msra.mxu0 %v22
    %45 = vmatpush.msra.mxu0 %v21
    %46 = vmatpush.msra.mxu0 %v20
    %47 = vmatpush.msra.mxu0 %v19
    %48 = vmatpush.msra.mxu0 %v18
    %49 = vmatpush.msra.mxu0 %v17
    %50 = vmatmul.f32.gmra.mxu0 %v29
    %v51 = vpop.f32.mrf.mxu0
    %v52 = vadd.f32 %v25, %v51
    %53 = vmatmul.f32.gmra.mxu0 %v32
    %v54 = vpop.f32.mrf.mxu0
    %v55 = vadd.f32 %v25, %v54
    %56 = vdwg.mxu0
    %vm57 = vcmask 261120
    %58 = vst.msk [vmem:[#allocation2] sm:$0xff] %vm57, %v52
    %59 = vst.msk [vmem:[#allocation2 + $0x8] sm:$0xff] %vm57, %v55
    // Predicated region
    $region14: #{tpu_custom_call.1} parent=1 // pred_check
      _
    $region15: #{tpu_custom_call.1} parent=1 // pred_check_branch
      %61 = sbr.rel (0) target = $region17
    $region16: #{tpu_custom_call.1} parent=1 // pred_region
      %63 = vsyncadd [#allocation3], 128
      %s64 = sshll.u32 [#allocation2], 4
      %s65 = int_to_ptr.vmem [resolvable:$true] %s64
      %s66 = sshll.u32 %s3, 4
      %s67 = int_to_ptr.hbm [resolvable:$true] %s66
      %72 = dma.vmem_to_hbm [thread:$0]  %s65, 128, %s67, [#allocation3], 128, 128, 8
    $region17: #{tpu_custom_call.1} parent=1 // pred_fallthru
      _
    // Predicated region
    $region18: #{tpu_custom_call.1} parent=1 // pred_check
      _
    $region19: #{tpu_custom_call.1} parent=1 // pred_check_branch
      %74 = sbr.rel (0) target = $region21
    $region20: #{tpu_custom_call.1} parent=1 // pred_region
      %76 = dma.done [#allocation3], 256
    $region21: #{tpu_custom_call.1} parent=1 // pred_fallthru
      _
    %77 = vsyncpa [#allocation3], 1

</llo_original>
